<compile_context>
chip_gen: v6e
topology: v6e:2x2x1
jax: 0.10.0
libtpu: 0.0.40
codegen_flags: <defaults>
</compile_context>

<pallas_src>
import jax
import jax.numpy as jnp
from jax.experimental import pallas as pl
from jax.experimental.pallas import tpu as pltpu

# Fixed hidden sizes from the PyTorch module.
H1, H2, H3, H_OUT = 512, 256, 128, 1


def _round_up(x, m):
    return (x + m - 1) // m * m


def _pad_axis(x, axis, target):
    pad = target - x.shape[axis]
    if pad == 0:
        return x
    widths = [(0, 0)] * x.ndim
    widths[axis] = (0, pad)
    return jnp.pad(x, widths)


def _choose_batch_tile(B):
    """Batch rows per grid step.

    Tiny batches: shrink (multiple of 16 = full bf16 sublane tile) to avoid
    wasted MXU work.  Large batches: grow to amortize per-grid-step overhead.
    """
    if B <= 128:
        return max(16, _round_up(B, 16))
    if B >= 2048:
        return 512
    if B >= 512:
        return 256
    return 128


def _discriminator_kernel(seq_ref, expr_ref,
                          w1s_ref, w1e_ref, b1_ref,
                          w2_ref, b2_ref,
                          w3_ref, b3_ref,
                          w4_ref, b4_ref,
                          o_ref):
    # Layer 1: split matmul replaces the JAX-side concat (two accumulating dots,
    # bf16 operands, f32 accumulation).
    h = jnp.dot(seq_ref[...], w1s_ref[...], preferred_element_type=jnp.float32)
    h = h + jnp.dot(expr_ref[...], w1e_ref[...],
                    preferred_element_type=jnp.float32)
    h = jnp.maximum(h + b1_ref[...], 0.0)                       # (TB, 512) f32

    # Layer 2.
    h = jnp.dot(h.astype(jnp.bfloat16), w2_ref[...],
                preferred_element_type=jnp.float32)
    h = jnp.maximum(h + b2_ref[...], 0.0)                       # (TB, 256) f32

    # Layer 3.
    h = jnp.dot(h.astype(jnp.bfloat16), w3_ref[...],
                preferred_element_type=jnp.float32)
    h = jnp.maximum(h + b3_ref[...], 0.0)                       # (TB, 128) f32

    # Layer 4 (128 -> 1): VPU multiply + XLU lane reduction instead of an N=1
    # MXU pass; keep it in f32 for the pre-sigmoid logit.
    logits = jnp.sum(h * w4_ref[...], axis=-1, keepdims=True) + b4_ref[...]

    # Sigmoid: exp on the EUP, approximate reciprocal on the EUP slot.
    o_ref[...] = pl.reciprocal(1.0 + jnp.exp(-logits), approx=True)


def init_params(key, sequence_length, expression_dim):
    """Deterministic synthetic parameters matching nn.Linear shapes.

    Stored transposed: w_i has shape (in_features, out_features); b_i (1, out)."""
    d_in = sequence_length * 4 + expression_dim
    dims = [(d_in, H1), (H1, H2), (H2, H3), (H3, H_OUT)]
    params = []
    for i, (din, dout) in enumerate(dims):
        kw, kb = jax.random.split(jax.random.fold_in(key, i))
        scale = 1.0 / jnp.sqrt(jnp.float32(din))
        w = jax.random.uniform(kw, (din, dout), jnp.float32, -scale, scale)
        b = jax.random.uniform(kb, (1, dout), jnp.float32, -scale, scale)
        params.append((w, b))
    return params


def _tile_bytes(rows, cols, itemsize):
    # VMEM buffers round up to (8, 128) tiles.
    return _round_up(rows, 8) * _round_up(cols, 128) * itemsize


def _vmem_limit_bytes(tb, d_seq_p, d_expr_p):
    # Pipelined (double-buffered) inputs/outputs + resident weights.
    act_in = _tile_bytes(tb, d_seq_p, 2) + _tile_bytes(tb, d_expr_p, 2)
    act_out = _tile_bytes(tb, H_OUT, 4)
    wts = (_tile_bytes(d_seq_p, H1, 2) + _tile_bytes(d_expr_p, H1, 2)
           + _tile_bytes(H1, H2, 2) + _tile_bytes(H2, H3, 2)
           + _tile_bytes(1, H1, 4) + _tile_bytes(1, H2, 4)
           + _tile_bytes(1, H3, 4) + _tile_bytes(1, H3, 4)
           + _tile_bytes(1, 1, 4))
    # In-kernel intermediates (f32 activation + bf16 recast per hidden layer).
    inter = sum(_tile_bytes(tb, h, 4) + _tile_bytes(tb, h, 2)
                for h in (H1, H2, H3))
    # Headroom for compiler scratch; cap below v7x physical VMEM (64 MiB/TC).
    return min(2 * (act_in + act_out + wts) + 2 * inter + (4 << 20), 60 << 20)


def discriminator_forward(sequence, expression, params, *, tb=None):
    """sequence: (B, seq_len, 4), expression: (B, expr_dim) -> (B, 1) f32."""
    B = sequence.shape[0]
    seq_flat = sequence.reshape(B, -1).astype(jnp.float32)       # (B, seq_len*4)
    expr = expression.astype(jnp.float32)                        # (B, expr_dim)

    (w1, b1), (w2, b2), (w3, b3), (w4, b4) = params
    d_seq, d_expr = seq_flat.shape[1], expr.shape[1]

    if tb is None:
        tb = _choose_batch_tile(B)

    # Lane-align the two feature chunks (zero cols in x / zero rows in w1).
    d_seq_p = _round_up(d_seq, 128)
    d_expr_p = _round_up(d_expr, 128)
    seq_p = _pad_axis(seq_flat, 1, d_seq_p)
    expr_p = _pad_axis(expr, 1, d_expr_p)
    w1s = _pad_axis(w1[:d_seq], 0, d_seq_p)                      # (d_seq_p, 512)
    w1e = _pad_axis(w1[d_seq:], 0, d_expr_p)                     # (d_expr_p, 512)

    # Pad the batch to the tile size.
    b_p = _round_up(max(B, 1), tb)
    seq_p = _pad_axis(seq_p, 0, b_p)
    expr_p = _pad_axis(expr_p, 0, b_p)

    # bf16 on the MXU path; biases and the tiny last layer stay f32.
    seq_p = seq_p.astype(jnp.bfloat16)
    expr_p = expr_p.astype(jnp.bfloat16)
    w1s = w1s.astype(jnp.bfloat16)
    w1e = w1e.astype(jnp.bfloat16)
    w2b = w2.astype(jnp.bfloat16)
    w3b = w3.astype(jnp.bfloat16)
    w4_row = w4.reshape(1, H3).astype(jnp.float32)               # (1, 128)
    b4_ = b4.reshape(1, 1).astype(jnp.float32)

    grid = (b_p // tb,)

    def resident(a):  # weight/bias stays on the same block for every grid step
        return pl.BlockSpec(a.shape, lambda i: (0, 0))

    in_specs = [
        pl.BlockSpec((tb, d_seq_p), lambda i: (i, 0)),
        pl.BlockSpec((tb, d_expr_p), lambda i: (i, 0)),
        resident(w1s), resident(w1e), resident(b1),
        resident(w2b), resident(b2),
        resident(w3b), resident(b3),
        resident(w4_row), resident(b4_),
    ]
    out_specs = pl.BlockSpec((tb, H_OUT), lambda i: (i, 0))

    flops = 2 * b_p * (d_seq_p * H1 + d_expr_p * H1 + H1 * H2 + H2 * H3 + H3)
    bytes_accessed = (b_p * (d_seq_p + d_expr_p) * 2
                      + (d_seq_p + d_expr_p) * H1 * 2
                      + H1 * H2 * 2 + H2 * H3 * 2
                      + (H1 + H2 + H3 + H3 + 1) * 4
                      + b_p * H_OUT * 4)

    out = pl.pallas_call(
        _discriminator_kernel,
        out_shape=jax.ShapeDtypeStruct((b_p, H_OUT), jnp.float32),
        grid=grid,
        in_specs=in_specs,
        out_specs=out_specs,
        compiler_params=pltpu.CompilerParams(
            dimension_semantics=("parallel",),
            vmem_limit_bytes=_vmem_limit_bytes(tb, d_seq_p, d_expr_p)),
        cost_estimate=pl.CostEstimate(flops=flops,
                                      transcendentals=b_p,
                                      bytes_accessed=bytes_accessed),
    )(seq_p, expr_p, w1s, w1e, b1, w2b, b2, w3b, b3, w4_row, b4_)

    return out[:B]


def _reference_forward_f32(sequence, expression, params):
    B = sequence.shape[0]
    x = jnp.concatenate([sequence.reshape(B, -1), expression], axis=1)
    x = x.astype(jnp.float32)
    (w1, b1), (w2, b2), (w3, b3), (w4, b4) = params
    h = jnp.maximum(x @ w1 + b1, 0.0)
    h = jnp.maximum(h @ w2 + b2, 0.0)
    h = jnp.maximum(h @ w3 + b3, 0.0)
    return jax.nn.sigmoid(h @ w4 + b4)


def _reference_forward_bf16(sequence, expression, params):
    # Mirrors the kernel's bf16-operand / f32-accumulate arithmetic.
    B = sequence.shape[0]
    x = jnp.concatenate([sequence.reshape(B, -1), expression], axis=1)
    x = x.astype(jnp.float32)
    (w1, b1), (w2, b2), (w3, b3), (w4, b4) = params
    h = jnp.dot(x.astype(jnp.bfloat16), w1.astype(jnp.bfloat16),
                preferred_element_type=jnp.float32)
    h = jnp.maximum(h + b1, 0.0)
    h = jnp.dot(h.astype(jnp.bfloat16), w2.astype(jnp.bfloat16),
                preferred_element_type=jnp.float32)
    h = jnp.maximum(h + b2, 0.0)
    h = jnp.dot(h.astype(jnp.bfloat16), w3.astype(jnp.bfloat16),
                preferred_element_type=jnp.float32)
    h = jnp.maximum(h + b3, 0.0)
    return jax.nn.sigmoid(h @ w4 + b4)


if __name__ == "__main__":
    key = jax.random.PRNGKey(0)
    k_seq, k_expr, k_params = jax.random.split(key, 3)

    sequence_length = 8     # small but representative
    expression_dim = 32
    batch = 2

    sequence = jax.random.uniform(k_seq, (batch, sequence_length, 4), jnp.float32)
    expression = jax.random.normal(k_expr, (batch, expression_dim), jnp.float32)

    params = init_params(k_params, sequence_length, expression_dim)

    out = discriminator_forward(sequence, expression, params)
    out = jax.block_until_ready(out)
    assert out.shape == (batch, 1)

    ref_bf16 = _reference_forward_bf16(sequence, expression, params)
    ref_f32 = _reference_forward_f32(sequence, expression, params)
    assert jnp.allclose(out, ref_bf16, atol=1e-2, rtol=1e-2), \
        "mismatch vs bf16-path reference"
    assert jnp.allclose(out, ref_f32, atol=5e-2, rtol=5e-2), \
        "mismatch vs f32 reference"

    print("KERNEL_OK")
</pallas_src>

<mosaic_0001>
module attributes {stable_mosaic.version = 11 : i64} {
  func.func @_discriminator_kernel(%arg0: i32, %arg1: memref<16x128xbf16, #tpu.memory_space<vmem>>, %arg2: memref<16x128xbf16, #tpu.memory_space<vmem>>, %arg3: memref<128x512xbf16, #tpu.memory_space<vmem>>, %arg4: memref<128x512xbf16, #tpu.memory_space<vmem>>, %arg5: memref<1x512xf32, #tpu.memory_space<vmem>>, %arg6: memref<512x256xbf16, #tpu.memory_space<vmem>>, %arg7: memref<1x256xf32, #tpu.memory_space<vmem>>, %arg8: memref<256x128xbf16, #tpu.memory_space<vmem>>, %arg9: memref<1x128xf32, #tpu.memory_space<vmem>>, %arg10: memref<1x128xf32, #tpu.memory_space<vmem>>, %arg11: memref<1x1xf32, #tpu.memory_space<vmem>>, %arg12: memref<16x1xf32, #tpu.memory_space<vmem>>) attributes {dimension_semantics = [#tpu.dimension_semantics<parallel>], iteration_bounds = array<i64: 1>, scalar_prefetch = 0 : i64, scratch_operands = 0 : i64, tpu.core_type = #tpu.core_type<tc>, window_params = [{transform_indices = @transform_0, window_bounds = array<i64: 16, 128>}, {transform_indices = @transform_1, window_bounds = array<i64: 16, 128>}, {pipeline_mode = #tpu.pipeline_mode<synchronous>, transform_indices = @transform_2, window_bounds = array<i64: 128, 512>}, {pipeline_mode = #tpu.pipeline_mode<synchronous>, transform_indices = @transform_3, window_bounds = array<i64: 128, 512>}, {pipeline_mode = #tpu.pipeline_mode<synchronous>, transform_indices = @transform_4, window_bounds = array<i64: 1, 512>}, {pipeline_mode = #tpu.pipeline_mode<synchronous>, transform_indices = @transform_5, window_bounds = array<i64: 512, 256>}, {pipeline_mode = #tpu.pipeline_mode<synchronous>, transform_indices = @transform_6, window_bounds = array<i64: 1, 256>}, {pipeline_mode = #tpu.pipeline_mode<synchronous>, transform_indices = @transform_7, window_bounds = array<i64: 256, 128>}, {pipeline_mode = #tpu.pipeline_mode<synchronous>, transform_indices = @transform_8, window_bounds = array<i64: 1, 128>}, {pipeline_mode = #tpu.pipeline_mode<synchronous>, transform_indices = @transform_9, window_bounds = array<i64: 1, 128>}, {pipeline_mode = #tpu.pipeline_mode<synchronous>, transform_indices = @transform_10, window_bounds = array<i64: 1, 1>}, {transform_indices = @transform_11, window_bounds = array<i64: 16, 1>}]} {
    %c0 = arith.constant 0 : index
    %c0_0 = arith.constant 0 : index
    %0 = vector.load %arg1[%c0, %c0_0] : memref<16x128xbf16, #tpu.memory_space<vmem>>, vector<16x128xbf16>
    %c0_1 = arith.constant 0 : index
    %c0_2 = arith.constant 0 : index
    %1 = vector.load %arg3[%c0_1, %c0_2] : memref<128x512xbf16, #tpu.memory_space<vmem>>, vector<128x512xbf16>
    %cst = arith.constant dense<0.000000e+00> : vector<16x512xf32>
    %2 = tpu.matmul %0, %1, %cst {dimension_numbers = #tpu.dot_dimension_numbers<[1], [0], [0], [1], [0, 0, 1, 1], [], []>} : vector<16x128xbf16>, vector<128x512xbf16>, vector<16x512xf32> -> vector<16x512xf32>
    %c0_3 = arith.constant 0 : index
    %c0_4 = arith.constant 0 : index
    %3 = vector.load %arg2[%c0_3, %c0_4] : memref<16x128xbf16, #tpu.memory_space<vmem>>, vector<16x128xbf16>
    %c0_5 = arith.constant 0 : index
    %c0_6 = arith.constant 0 : index
    %4 = vector.load %arg4[%c0_5, %c0_6] : memref<128x512xbf16, #tpu.memory_space<vmem>>, vector<128x512xbf16>
    %cst_7 = arith.constant dense<0.000000e+00> : vector<16x512xf32>
    %5 = tpu.matmul %3, %4, %cst_7 {dimension_numbers = #tpu.dot_dimension_numbers<[1], [0], [0], [1], [0, 0, 1, 1], [], []>} : vector<16x128xbf16>, vector<128x512xbf16>, vector<16x512xf32> -> vector<16x512xf32>
    %6 = arith.addf %2, %5 : vector<16x512xf32>
    %c0_8 = arith.constant 0 : index
    %c0_9 = arith.constant 0 : index
    %7 = vector.load %arg5[%c0_8, %c0_9] : memref<1x512xf32, #tpu.memory_space<vmem>>, vector<1x512xf32>
    %8 = vector.broadcast %7 : vector<1x512xf32> to vector<16x512xf32>
    %9 = arith.addf %6, %8 : vector<16x512xf32>
    %cst_10 = arith.constant 0.000000e+00 : f32
    %10 = vector.broadcast %cst_10 : f32 to vector<16x512xf32>
    %11 = arith.maximumf %9, %10 : vector<16x512xf32>
    %12 = arith.truncf %11 : vector<16x512xf32> to vector<16x512xbf16>
    %c0_11 = arith.constant 0 : index
    %c0_12 = arith.constant 0 : index
    %13 = vector.load %arg6[%c0_11, %c0_12] : memref<512x256xbf16, #tpu.memory_space<vmem>>, vector<512x256xbf16>
    %cst_13 = arith.constant dense<0.000000e+00> : vector<16x256xf32>
    %14 = tpu.matmul %12, %13, %cst_13 {dimension_numbers = #tpu.dot_dimension_numbers<[1], [0], [0], [1], [0, 0, 1, 1], [], []>} : vector<16x512xbf16>, vector<512x256xbf16>, vector<16x256xf32> -> vector<16x256xf32>
    %c0_14 = arith.constant 0 : index
    %c0_15 = arith.constant 0 : index
    %15 = vector.load %arg7[%c0_14, %c0_15] : memref<1x256xf32, #tpu.memory_space<vmem>>, vector<1x256xf32>
    %16 = vector.broadcast %15 : vector<1x256xf32> to vector<16x256xf32>
    %17 = arith.addf %14, %16 : vector<16x256xf32>
    %cst_16 = arith.constant 0.000000e+00 : f32
    %18 = vector.broadcast %cst_16 : f32 to vector<16x256xf32>
    %19 = arith.maximumf %17, %18 : vector<16x256xf32>
    %20 = arith.truncf %19 : vector<16x256xf32> to vector<16x256xbf16>
    %c0_17 = arith.constant 0 : index
    %c0_18 = arith.constant 0 : index
    %21 = vector.load %arg8[%c0_17, %c0_18] : memref<256x128xbf16, #tpu.memory_space<vmem>>, vector<256x128xbf16>
    %cst_19 = arith.constant dense<0.000000e+00> : vector<16x128xf32>
    %22 = tpu.matmul %20, %21, %cst_19 {dimension_numbers = #tpu.dot_dimension_numbers<[1], [0], [0], [1], [0, 0, 1, 1], [], []>} : vector<16x256xbf16>, vector<256x128xbf16>, vector<16x128xf32> -> vector<16x128xf32>
    %c0_20 = arith.constant 0 : index
    %c0_21 = arith.constant 0 : index
    %23 = vector.load %arg9[%c0_20, %c0_21] : memref<1x128xf32, #tpu.memory_space<vmem>>, vector<1x128xf32>
    %24 = vector.broadcast %23 : vector<1x128xf32> to vector<16x128xf32>
    %25 = arith.addf %22, %24 : vector<16x128xf32>
    %cst_22 = arith.constant 0.000000e+00 : f32
    %26 = vector.broadcast %cst_22 : f32 to vector<16x128xf32>
    %27 = arith.maximumf %25, %26 : vector<16x128xf32>
    %c0_23 = arith.constant 0 : index
    %c0_24 = arith.constant 0 : index
    %28 = vector.load %arg10[%c0_23, %c0_24] : memref<1x128xf32, #tpu.memory_space<vmem>>, vector<1x128xf32>
    %29 = vector.broadcast %28 : vector<1x128xf32> to vector<16x128xf32>
    %30 = arith.mulf %27, %29 : vector<16x128xf32>
    %cst_25 = arith.constant dense<0.000000e+00> : vector<16xf32>
    %31 = vector.multi_reduction <add>, %30, %cst_25 [1] : vector<16x128xf32> to vector<16xf32>
    %32 = vector.shape_cast %31 : vector<16xf32> to vector<16x1xf32>
    %c0_26 = arith.constant 0 : index
    %c0_27 = arith.constant 0 : index
    %33 = vector.load %arg11[%c0_26, %c0_27] : memref<1x1xf32, #tpu.memory_space<vmem>>, vector<1x1xf32>
    %34 = vector.broadcast %33 : vector<1x1xf32> to vector<16x1xf32>
    %35 = arith.addf %32, %34 : vector<16x1xf32>
    %cst_28 = arith.constant 0.000000e+00 : f32
    %36 = vector.broadcast %cst_28 : f32 to vector<16x1xf32>
    %37 = arith.subf %36, %35 : vector<16x1xf32>
    %38 = math.exp %37 : vector<16x1xf32>
    %cst_29 = arith.constant 1.000000e+00 : f32
    %39 = vector.broadcast %cst_29 : f32 to vector<16x1xf32>
    %40 = arith.addf %39, %38 : vector<16x1xf32>
    %41 = tpu.reciprocal %40 {approx = true} : vector<16x1xf32> -> vector<16x1xf32>
    %c0_30 = arith.constant 0 : index
    %c0_31 = arith.constant 0 : index
    %42 = vector.load %arg12[%c0_30, %c0_31] : memref<16x1xf32, #tpu.memory_space<vmem>>, vector<16x1xf32>
    tpu.vector_store %arg12[%c0_30, %c0_31], %41 {strides = array<i32>} : memref<16x1xf32, #tpu.memory_space<vmem>>, vector<16x1xf32>,
    return
  }
  func.func @transform_0(%arg0: i32) -> (i32, i32) {
    %c0_i32 = arith.constant 0 : i32
    %c0_i32_0 = arith.constant 0 : i32
    return %arg0, %c0_i32 : i32, i32
  }
  func.func @transform_1(%arg0: i32) -> (i32, i32) {
    %c0_i32 = arith.constant 0 : i32
    %c0_i32_0 = arith.constant 0 : i32
    return %arg0, %c0_i32 : i32, i32
  }
  func.func @transform_2(%arg0: i32) -> (i32, i32) {
    %c0_i32 = arith.constant 0 : i32
    %c0_i32_0 = arith.constant 0 : i32
    %c0_i32_1 = arith.constant 0 : i32
    return %c0_i32, %c0_i32_0 : i32, i32
  }
  func.func @transform_3(%arg0: i32) -> (i32, i32) {
    %c0_i32 = arith.constant 0 : i32
    %c0_i32_0 = arith.constant 0 : i32
    %c0_i32_1 = arith.constant 0 : i32
    return %c0_i32, %c0_i32_0 : i32, i32
  }
  func.func @transform_4(%arg0: i32) -> (i32, i32) {
    %c0_i32 = arith.constant 0 : i32
    %c0_i32_0 = arith.constant 0 : i32
    %c0_i32_1 = arith.constant 0 : i32
    return %c0_i32, %c0_i32_0 : i32, i32
  }
  func.func @transform_5(%arg0: i32) -> (i32, i32) {
    %c0_i32 = arith.constant 0 : i32
    %c0_i32_0 = arith.constant 0 : i32
    %c0_i32_1 = arith.constant 0 : i32
    return %c0_i32, %c0_i32_0 : i32, i32
  }
  func.func @transform_6(%arg0: i32) -> (i32, i32) {
    %c0_i32 = arith.constant 0 : i32
    %c0_i32_0 = arith.constant 0 : i32
    %c0_i32_1 = arith.constant 0 : i32
    return %c0_i32, %c0_i32_0 : i32, i32
  }
  func.func @transform_7(%arg0: i32) -> (i32, i32) {
    %c0_i32 = arith.constant 0 : i32
    %c0_i32_0 = arith.constant 0 : i32
    %c0_i32_1 = arith.constant 0 : i32
    return %c0_i32, %c0_i32_0 : i32, i32
  }
  func.func @transform_8(%arg0: i32) -> (i32, i32) {
    %c0_i32 = arith.constant 0 : i32
    %c0_i32_0 = arith.constant 0 : i32
    %c0_i32_1 = arith.constant 0 : i32
    return %c0_i32, %c0_i32_0 : i32, i32
  }
  func.func @transform_9(%arg0: i32) -> (i32, i32) {
    %c0_i32 = arith.constant 0 : i32
    %c0_i32_0 = arith.constant 0 : i32
    %c0_i32_1 = arith.constant 0 : i32
    return %c0_i32, %c0_i32_0 : i32, i32
  }
  func.func @transform_10(%arg0: i32) -> (i32, i32) {
    %c0_i32 = arith.constant 0 : i32
    %c0_i32_0 = arith.constant 0 : i32
    %c0_i32_1 = arith.constant 0 : i32
    return %c0_i32, %c0_i32_0 : i32, i32
  }
  func.func @transform_11(%arg0: i32) -> (i32, i32) {
    %c0_i32 = arith.constant 0 : i32
    %c0_i32_0 = arith.constant 0 : i32
    return %arg0, %c0_i32 : i32, i32
  }
}

</mosaic_0001>

<llo_original>
// kernel: tpu_custom_call.1
$region0: #{tpu_custom_call.1}
  #allocation0 [shape = 'u32[]', space=smem, size = 0x4, offset = 0x4, fixed_abs, tag = 'smem constant byte address 0x4 - core index']
  #allocation1 [shape = 'u32[144,128]{1,0:T(1,128)}', space=vmem, size = 0x12000, scoped, tag = 'internal scratch']
  #allocation2 [shape = 'f32[1,1]{1,0:T(1,128)S(1)}', space=vmem, size = 0x200, scoped, tag = 'scoped memory for tpu_custom_call.1']
  %s0 = inlined_call_operand.hbm [shape: bf16[16,128], index: 0, kind: input, shape index: {}]
  %s1 = inlined_call_operand.hbm [shape: bf16[16,128], index: 1, kind: input, shape index: {}]
  %s2 = inlined_call_operand.hbm [shape: bf16[128,512], index: 2, kind: input, shape index: {}]
  %s3 = inlined_call_operand.hbm [shape: bf16[128,512], index: 3, kind: input, shape index: {}]
  %s4 = inlined_call_operand.vmem [shape: f32[1,512], index: 4, kind: input, shape index: {}]
  %s5 = inlined_call_operand.hbm [shape: bf16[512,256], index: 5, kind: input, shape index: {}]
  %s6 = inlined_call_operand.vmem [shape: f32[1,256], index: 6, kind: input, shape index: {}]
  %s7 = inlined_call_operand.hbm [shape: bf16[256,128], index: 7, kind: input, shape index: {}]
  %s8 = inlined_call_operand.vmem [shape: f32[1,128], index: 8, kind: input, shape index: {}]
  %s9 = inlined_call_operand.vmem [shape: f32[1,128], index: 9, kind: input, shape index: {}]
  %s10 = inlined_call_operand.<no memory space> [shape: f32[1,1], index: 10, kind: input, shape index: {}]
  %s11 = inlined_call_operand.vmem [shape: f32[16,1], index: 11, kind: output, shape index: {}]
  %s12 = sld [smem:[#allocation0]]
  $region78: #{tpu_custom_call.1} parent=0
    _
  %s14 = ssub.s32 1, %s12
  %s15 = scalar_select 0, %s14, %s12
  %v16 = vstv %s10
  %17 = vst [vmem:[#allocation2] sm:$0x1] %v16
  $region1: #{tpu_custom_call.1} parent=0
    #allocation3 [shape = 'u8[4096]{0}', space=vmem, size = 0x1000, scoped, tag = 'input window, operand 0, single buffered']
    #allocation4 [shape = 's32[1]{0}', space=sflag, size = 0x4, scoped, tag = 'scoped memory for tpu_custom_call.1']
    #allocation5 [shape = 'u8[4096]{0}', space=vmem, size = 0x1000, scoped, tag = 'input window, operand 1, single buffered']
    #allocation6 [shape = 's32[1]{0}', space=sflag, size = 0x4, scoped, tag = 'scoped memory for tpu_custom_call.1']
    #allocation7 [shape = 'u8[131072]{0}', space=vmem, size = 0x20000, scoped, tag = 'input window, operand 2, single buffered']
    #allocation8 [shape = 'u8[131072]{0}', space=vmem, size = 0x20000, scoped, tag = 'input window, operand 3, single buffered']
    #allocation9 [shape = 's32[1]{0}', space=sflag, size = 0x4, scoped, tag = 'scoped memory for tpu_custom_call.1']
    #allocation10 [shape = 'u8[262144]{0}', space=vmem, size = 0x40000, scoped, tag = 'input window, operand 5, single buffered']
    #allocation11 [shape = 'u8[65536]{0}', space=vmem, size = 0x10000, scoped, tag = 'input window, operand 7, single buffered']
    #allocation12 [shape = 's32[1]{0}', space=sflag, size = 0x4, scoped, tag = 'scoped memory for tpu_custom_call.1']
    %18 = vsyncpa [#allocation4], 0
    %19 = vsyncpa [#allocation6], 0
    %20 = vsyncpa [#allocation9], 0
    %21 = vsyncpa [#allocation12], 0
    // Predicated region
    $region2: #{tpu_custom_call.1} parent=1 // pred_check
      _
    $region3: #{tpu_custom_call.1} parent=1 // pred_check_branch
      %23 = sbr.rel (0) target = $region5
    $region4: #{tpu_custom_call.1} parent=1 // pred_region
      %s25 = ssub.s32 128, 128
      %26 = vsyncadd [#allocation4], %s25
      %s27 = sshll.u32 [#allocation3], 4
      %s28 = int_to_ptr.vmem [resolvable:$true] %s27
      %33 = dma.hbm_to_vmem [thread:$0]  %s0, 128, %s28, [#allocation4], 64, 64, 4
    $region5: #{tpu_custom_call.1} parent=1 // pred_fallthru
      _
    // Predicated region
    $region6: #{tpu_custom_call.1} parent=1 // pred_check
      _
    $region7: #{tpu_custom_call.1} parent=1 // pred_check_branch
      %35 = sbr.rel (0) target = $region9
    $region8: #{tpu_custom_call.1} parent=1 // pred_region
      %s37 = ssub.s32 128, 128
      %38 = vsyncadd [#allocation6], %s37
      %s39 = sshll.u32 [#allocation5], 4
      %s40 = int_to_ptr.vmem [resolvable:$true] %s39
      %45 = dma.hbm_to_vmem [thread:$0]  %s1, 128, %s40, [#allocation6], 64, 64, 4
    $region9: #{tpu_custom_call.1} parent=1 // pred_fallthru
      _
    // Predicated region
    $region10: #{tpu_custom_call.1} parent=1 // pred_check
      _
    $region11: #{tpu_custom_call.1} parent=1 // pred_check_branch
      %47 = sbr.rel (0) target = $region13
    $region12: #{tpu_custom_call.1} parent=1 // pred_region
      %s49 = ssub.s32 4096, 4096
      %50 = vsyncadd [#allocation6], %s49
      %s51 = sshll.u32 [#allocation7], 4
      %s52 = int_to_ptr.vmem [resolvable:$true] %s51
      %57 = dma.hbm_to_vmem [thread:$0]  %s2, 4096, %s52, [#allocation6], 256, 256, 16
    $region13: #{tpu_custom_call.1} parent=1 // pred_fallthru
      _
    // Predicated region
    $region14: #{tpu_custom_call.1} parent=1 // pred_check
      _
    $region15: #{tpu_custom_call.1} parent=1 // pred_check_branch
      %59 = sbr.rel (0) target = $region17
    $region16: #{tpu_custom_call.1} parent=1 // pred_region
      %s61 = ssub.s32 4096, 4096
      %62 = vsyncadd [#allocation9], %s61
      %s63 = sshll.u32 [#allocation8], 4
      %s64 = int_to_ptr.vmem [resolvable:$true] %s63
      %69 = dma.hbm_to_vmem [thread:$0]  %s3, 4096, %s64, [#allocation9], 256, 256, 16
    $region17: #{tpu_custom_call.1} parent=1 // pred_fallthru
      _
    // Predicated region
    $region18: #{tpu_custom_call.1} parent=1 // pred_check
      _
    $region19: #{tpu_custom_call.1} parent=1 // pred_check_branch
      %71 = sbr.rel (0) target = $region21
    $region20: #{tpu_custom_call.1} parent=1 // pred_region
      _
    $region21: #{tpu_custom_call.1} parent=1 // pred_fallthru
      _
    // Predicated region
    $region22: #{tpu_custom_call.1} parent=1 // pred_check
      _
    $region23: #{tpu_custom_call.1} parent=1 // pred_check_branch
      %73 = sbr.rel (0) target = $region25
    $region24: #{tpu_custom_call.1} parent=1 // pred_region
      %s75 = ssub.s32 8192, 8192
      %76 = vsyncadd [#allocation9], %s75
      %s77 = sshll.u32 [#allocation10], 4
      %s78 = int_to_ptr.vmem [resolvable:$true] %s77
      %83 = dma.hbm_to_vmem [thread:$0]  %s5, 8192, %s78, [#allocation9], 128, 128, 8
    $region25: #{tpu_custom_call.1} parent=1 // pred_fallthru
      _
    // Predicated region
    $region26: #{tpu_custom_call.1} parent=1 // pred_check
      _
    $region27: #{tpu_custom_call.1} parent=1 // pred_check_branch
      %85 = sbr.rel (0) target = $region29
    $region28: #{tpu_custom_call.1} parent=1 // pred_region
      _
    $region29: #{tpu_custom_call.1} parent=1 // pred_fallthru
      _
    // Predicated region
    $region30: #{tpu_custom_call.1} parent=1 // pred_check
      _
    $region31: #{tpu_custom_call.1} parent=1 // pred_check_branch
      %87 = sbr.rel (0) target = $region33
    $region32: #{tpu_custom_call.1} parent=1 // pred_region
      %s89 = ssub.s32 2048, 2048
      %90 = vsyncadd [#allocation12], %s89
      %s91 = sshll.u32 [#allocation11], 4
      %s92 = int_to_ptr.vmem [resolvable:$true] %s91
      %97 = dma.hbm_to_vmem [thread:$0]  %s7, 2048, %s92, [#allocation12], 64, 64, 4
    $region33: #{tpu_custom_call.1} parent=1 // pred_fallthru
      _
    // Predicated region
    $region34: #{tpu_custom_call.1} parent=1 // pred_check
      _
    $region35: #{tpu_custom_call.1} parent=1 // pred_check_branch
      %99 = sbr.rel (0) target = $region37
    $region36: #{tpu_custom_call.1} parent=1 // pred_region
      _
    $region37: #{tpu_custom_call.1} parent=1 // pred_fallthru
      _
    // Predicated region
    $region38: #{tpu_custom_call.1} parent=1 // pred_check
      _
    $region39: #{tpu_custom_call.1} parent=1 // pred_check_branch
      %101 = sbr.rel (0) target = $region41
    $region40: #{tpu_custom_call.1} parent=1 // pred_region
      _
    $region41: #{tpu_custom_call.1} parent=1 // pred_fallthru
      _
    // Predicated region
    $region42: #{tpu_custom_call.1} parent=1 // pred_check
      _
    $region43: #{tpu_custom_call.1} parent=1 // pred_check_branch
      %103 = sbr.rel (0) target = $region45
    $region44: #{tpu_custom_call.1} parent=1 // pred_region
      _
    $region45: #{tpu_custom_call.1} parent=1 // pred_fallthru
      _
    // Predicated region
    $region46: #{tpu_custom_call.1} parent=1 // pred_check
      _
    $region47: #{tpu_custom_call.1} parent=1 // pred_check_branch
      %105 = sbr.rel (0) target = $region49
    $region48: #{tpu_custom_call.1} parent=1 // pred_region
      %106 = dma.done [#allocation4], 128
    $region49: #{tpu_custom_call.1} parent=1 // pred_fallthru
      _
    // Predicated region
    $region50: #{tpu_custom_call.1} parent=1 // pred_check
      _
    $region51: #{tpu_custom_call.1} parent=1 // pred_check_branch
      %108 = sbr.rel (0) target = $region53
    $region52: #{tpu_custom_call.1} parent=1 // pred_region
      %109 = dma.done [#allocation6], 128
    $region53: #{tpu_custom_call.1} parent=1 // pred_fallthru
      _
    // Predicated region
    $region54: #{tpu_custom_call.1} parent=1 // pred_check
      _
    $region55: #{tpu_custom_call.1} parent=1 // pred_check_branch
      %111 = sbr.rel (0) target = $region57
    $region56: #{tpu_custom_call.1} parent=1 // pred_region
      %112 = dma.done [#allocation6], 4096
    $region57: #{tpu_custom_call.1} parent=1 // pred_fallthru
      _
    // Predicated region
    $region58: #{tpu_custom_call.1} parent=1 // pred_check
      _
    $region59: #{tpu_custom_call.1} parent=1 // pred_check_branch
      %114 = sbr.rel (0) target = $region61
    $region60: #{tpu_custom_call.1} parent=1 // pred_region
      %115 = dma.done [#allocation9], 4096
    $region61: #{tpu_custom_call.1} parent=1 // pred_fallthru
      _
    // Predicated region
    $region62: #{tpu_custom_call.1} parent=1 // pred_check
      _
    $region63: #{tpu_custom_call.1} parent=1 // pred_check_branch
      %117 = sbr.rel (0) target = $region65
    $region64: #{tpu_custom_call.1} parent=1 // pred_region
      %118 = dma.done [#allocation9], 8192
    $region65: #{tpu_custom_call.1} parent=1 // pred_fallthru
      _
    // Predicated region
    $region66: #{tpu_custom_call.1} parent=1 // pred_check
      _
    $region67: #{tpu_custom_call.1} parent=1 // pred_check_branch
      %120 = sbr.rel (0) target = $region69
    $region68: #{tpu_custom_call.1} parent=1 // pred_region
      %121 = dma.done [#allocation12], 2048
    $region69: #{tpu_custom_call.1} parent=1 // pred_fallthru
      _
    %v123 = vld [vmem:[#allocation3] sm:$0xf]
    %v124 = vld [vmem:[#allocation3 + $0x4] sm:$0xf]
    %v125 = vld [vmem:[#allocation7] sm:$0xff]
    %v126 = vld [vmem:[#allocation7 + $0x8] sm:$0xff]
    %v127 = vld [vmem:[#allocation7 + $0x10] sm:$0xff]
    %v128 = vld [vmem:[#allocation7 + $0x18] sm:$0xff]
    %v129 = vld [vmem:[#allocation7 + $0x20] sm:$0xff]
    %v130 = vld [vmem:[#allocation7 + $0x28] sm:$0xff]
    %v131 = vld [vmem:[#allocation7 + $0x30] sm:$0xff]
    %v132 = vld [vmem:[#allocation7 + $0x38] sm:$0xff]
    %v133 = vld [vmem:[#allocation7 + $0x40] sm:$0xff]
    %v134 = vld [vmem:[#allocation7 + $0x48] sm:$0xff]
    %v135 = vld [vmem:[#allocation7 + $0x50] sm:$0xff]
    %v136 = vld [vmem:[#allocation7 + $0x58] sm:$0xff]
    %v137 = vld [vmem:[#allocation7 + $0x60] sm:$0xff]
    %v138 = vld [vmem:[#allocation7 + $0x68] sm:$0xff]
    %v139 = vld [vmem:[#allocation7 + $0x70] sm:$0xff]
    %v140 = vld [vmem:[#allocation7 + $0x78] sm:$0xff]
    %v141 = vld [vmem:[#allocation7 + $0x80] sm:$0xff]
    %v142 = vld [vmem:[#allocation7 + $0x88] sm:$0xff]
    %v143 = vld [vmem:[#allocation7 + $0x90] sm:$0xff]
    %v144 = vld [vmem:[#allocation7 + $0x98] sm:$0xff]
    %v145 = vld [vmem:[#allocation7 + $0xa0] sm:$0xff]
    %v146 = vld [vmem:[#allocation7 + $0xa8] sm:$0xff]
    %v147 = vld [vmem:[#allocation7 + $0xb0] sm:$0xff]
    %v148 = vld [vmem:[#allocation7 + $0xb8] sm:$0xff]
    %v149 = vld [vmem:[#allocation7 + $0xc0] sm:$0xff]
    %v150 = vld [vmem:[#allocation7 + $0xc8] sm:$0xff]
    %v151 = vld [vmem:[#allocation7 + $0xd0] sm:$0xff]
    %v152 = vld [vmem:[#allocation7 + $0xd8] sm:$0xff]
    %v153 = vld [vmem:[#allocation7 + $0xe0] sm:$0xff]
    %v154 = vld [vmem:[#allocation7 + $0xe8] sm:$0xff]
    %v155 = vld [vmem:[#allocation7 + $0xf0] sm:$0xff]
    %v156 = vld [vmem:[#allocation7 + $0xf8] sm:$0xff]
    %v157 = vld [vmem:[#allocation5] sm:$0xf]
    %v158 = vld [vmem:[#allocation5 + $0x4] sm:$0xf]
    %v159 = vld [vmem:[#allocation8] sm:$0xff]
    %v160 = vld [vmem:[#allocation8 + $0x8] sm:$0xff]
    %v161 = vld [vmem:[#allocation8 + $0x10] sm:$0xff]
    %v162 = vld [vmem:[#allocation8 + $0x18] sm:$0xff]
    %v163 = vld [vmem:[#allocation8 + $0x20] sm:$0xff]
    %v164 = vld [vmem:[#allocation8 + $0x28] sm:$0xff]
    %v165 = vld [vmem:[#allocation8 + $0x30] sm:$0xff]
    %v166 = vld [vmem:[#allocation8 + $0x38] sm:$0xff]
    %v167 = vld [vmem:[#allocation8 + $0x40] sm:$0xff]
    %v168 = vld [vmem:[#allocation8 + $0x48] sm:$0xff]
    %v169 = vld [vmem:[#allocation8 + $0x50] sm:$0xff]
    %v170 = vld [vmem:[#allocation8 + $0x58] sm:$0xff]
    %v171 = vld [vmem:[#allocation8 + $0x60] sm:$0xff]
    %v172 = vld [vmem:[#allocation8 + $0x68] sm:$0xff]
    %v173 = vld [vmem:[#allocation8 + $0x70] sm:$0xff]
    %v174 = vld [vmem:[#allocation8 + $0x78] sm:$0xff]
    %v175 = vld [vmem:[#allocation8 + $0x80] sm:$0xff]
    %v176 = vld [vmem:[#allocation8 + $0x88] sm:$0xff]
    %v177 = vld [vmem:[#allocation8 + $0x90] sm:$0xff]
    %v178 = vld [vmem:[#allocation8 + $0x98] sm:$0xff]
    %v179 = vld [vmem:[#allocation8 + $0xa0] sm:$0xff]
    %v180 = vld [vmem:[#allocation8 + $0xa8] sm:$0xff]
    %v181 = vld [vmem:[#allocation8 + $0xb0] sm:$0xff]
    %v182 = vld [vmem:[#allocation8 + $0xb8] sm:$0xff]
    %v183 = vld [vmem:[#allocation8 + $0xc0] sm:$0xff]
    %v184 = vld [vmem:[#allocation8 + $0xc8] sm:$0xff]
    %v185 = vld [vmem:[#allocation8 + $0xd0] sm:$0xff]
    %v186 = vld [vmem:[#allocation8 + $0xd8] sm:$0xff]
    %v187 = vld [vmem:[#allocation8 + $0xe0] sm:$0xff]
    %v188 = vld [vmem:[#allocation8 + $0xe8] sm:$0xff]
    %v189 = vld [vmem:[#allocation8 + $0xf0] sm:$0xff]
    %v190 = vld [vmem:[#allocation8 + $0xf8] sm:$0xff]
    %v193 = vunpack.c.l.b16 %v157
    %v194 = vunpack.c.l.b16 %v158
    %v195 = vpack.c.b16 %v194, %v193
    %v229 = vunpack.c.l.b16 %v159
    %v230 = vunpack.c.h.b16 %v159
    %v231 = vunpack.c.l.b16 %v160
    %v232 = vunpack.c.h.b16 %v160
    %v233 = vunpack.c.l.b16 %v161
    %v234 = vunpack.c.h.b16 %v161
    %v235 = vunpack.c.l.b16 %v162
    %v236 = vunpack.c.h.b16 %v162
    %v237 = vunpack.c.l.b16 %v163
    %v238 = vunpack.c.h.b16 %v163
    %v239 = vunpack.c.l.b16 %v164
    %v240 = vunpack.c.h.b16 %v164
    %v241 = vunpack.c.l.b16 %v165
    %v242 = vunpack.c.h.b16 %v165
    %v243 = vunpack.c.l.b16 %v166
    %v244 = vunpack.c.h.b16 %v166
    %v245 = vunpack.c.l.b16 %v167
    %v246 = vunpack.c.h.b16 %v167
    %v247 = vunpack.c.l.b16 %v168
    %v248 = vunpack.c.h.b16 %v168
    %v249 = vunpack.c.l.b16 %v169
    %v250 = vunpack.c.h.b16 %v169
    %v251 = vunpack.c.l.b16 %v170
    %v252 = vunpack.c.h.b16 %v170
    %v253 = vunpack.c.l.b16 %v171
    %v254 = vunpack.c.h.b16 %v171
    %v255 = vunpack.c.l.b16 %v172
    %v256 = vunpack.c.h.b16 %v172
    %v257 = vunpack.c.l.b16 %v173
    %v258 = vunpack.c.h.b16 %v173
    %v259 = vunpack.c.l.b16 %v174
    %v260 = vunpack.c.h.b16 %v174
    %v261 = vunpack.c.l.b16 %v175
    %v262 = vunpack.c.h.b16 %v175
    %v263 = vunpack.c.l.b16 %v176
    %v264 = vunpack.c.h.b16 %v176
    %v265 = vunpack.c.l.b16 %v177
    %v266 = vunpack.c.h.b16 %v177
    %v267 = vunpack.c.l.b16 %v178
    %v268 = vunpack.c.h.b16 %v178
    %v269 = vunpack.c.l.b16 %v179
    %v270 = vunpack.c.h.b16 %v179
    %v271 = vunpack.c.l.b16 %v180
    %v272 = vunpack.c.h.b16 %v180
    %v273 = vunpack.c.l.b16 %v181
    %v274 = vunpack.c.h.b16 %v181
    %v275 = vunpack.c.l.b16 %v182
    %v276 = vunpack.c.h.b16 %v182
    %v277 = vunpack.c.l.b16 %v183
    %v278 = vunpack.c.h.b16 %v183
    %v279 = vunpack.c.l.b16 %v184
    %v280 = vunpack.c.h.b16 %v184
    %v281 = vunpack.c.l.b16 %v185
    %v282 = vunpack.c.h.b16 %v185
    %v283 = vunpack.c.l.b16 %v186
    %v284 = vunpack.c.h.b16 %v186
    %v285 = vunpack.c.l.b16 %v187
    %v286 = vunpack.c.h.b16 %v187
    %v287 = vunpack.c.l.b16 %v188
    %v288 = vunpack.c.h.b16 %v188
    %v289 = vunpack.c.l.b16 %v189
    %v290 = vunpack.c.h.b16 %v189
    %v291 = vunpack.c.l.b16 %v190
    %v292 = vunpack.c.h.b16 %v190
    %v293 = vpack.c.b16 %v233, %v229
    %v294 = vpack.c.b16 %v234, %v230
    %v295 = vpack.c.b16 %v235, %v231
    %v296 = vpack.c.b16 %v236, %v232
    %v297 = vpack.c.b16 %v241, %v237
    %v298 = vpack.c.b16 %v242, %v238
    %v299 = vpack.c.b16 %v243, %v239
    %v300 = vpack.c.b16 %v244, %v240
    %v301 = vpack.c.b16 %v249, %v245
    %v302 = vpack.c.b16 %v250, %v246
    %v303 = vpack.c.b16 %v251, %v247
    %v304 = vpack.c.b16 %v252, %v248
    %v305 = vpack.c.b16 %v257, %v253
    %v306 = vpack.c.b16 %v258, %v254
    %v307 = vpack.c.b16 %v259, %v255
    %v308 = vpack.c.b16 %v260, %v256
    %v309 = vpack.c.b16 %v265, %v261
    %v310 = vpack.c.b16 %v266, %v262
    %v311 = vpack.c.b16 %v267, %v263
    %v312 = vpack.c.b16 %v268, %v264
    %v313 = vpack.c.b16 %v273, %v269
    %v314 = vpack.c.b16 %v274, %v270
    %v315 = vpack.c.b16 %v275, %v271
    %v316 = vpack.c.b16 %v276, %v272
    %v317 = vpack.c.b16 %v281, %v277
    %v318 = vpack.c.b16 %v282, %v278
    %v319 = vpack.c.b16 %v283, %v279
    %v320 = vpack.c.b16 %v284, %v280
    %v321 = vpack.c.b16 %v289, %v285
    %v322 = vpack.c.b16 %v290, %v286
    %v323 = vpack.c.b16 %v291, %v287
    %v324 = vpack.c.b16 %v292, %v288
    %357 = vmatprep.subr.bf16.mxu0 %v322
    %358 = vmatpush1.bf16.msra.mxu0 %v321
    %359 = vmatprep.subr.bf16.mxu0 %v318
    %360 = vmatpush1.bf16.msra.mxu0 %v317
    %361 = vmatprep.subr.bf16.mxu0 %v314
    %362 = vmatpush1.bf16.msra.mxu0 %v313
    %363 = vmatprep.subr.bf16.mxu0 %v310
    %364 = vmatpush1.bf16.msra.mxu0 %v309
    %365 = vmatprep.subr.bf16.mxu0 %v306
    %366 = vmatpush1.bf16.msra.mxu0 %v305
    %367 = vmatprep.subr.bf16.mxu0 %v302
    %368 = vmatpush1.bf16.msra.mxu0 %v301
    %369 = vmatprep.subr.bf16.mxu0 %v298
    %370 = vmatpush1.bf16.msra.mxu0 %v297
    %371 = vmatprep.subr.bf16.mxu0 %v294
    %372 = vmatpush1.bf16.msra.mxu0 %v293
    %373 = vmatprep.subr.bf16.mxu0 0
    %374 = vmatpush2.bf16.msra.mxu0 0
    %375 = vmatprep.subr.bf16.mxu0 0
    %376 = vmatpush2.bf16.msra.mxu0 0
    %377 = vmatprep.subr.bf16.mxu0 0
    %378 = vmatpush2.bf16.msra.mxu0 0
    %379 = vmatprep.subr.bf16.mxu0 0
    %380 = vmatpush2.bf16.msra.mxu0 0
    %381 = vmatprep.subr.bf16.mxu0 0
    %382 = vmatpush2.bf16.msra.mxu0 0
    %383 = vmatprep.subr.bf16.mxu0 0
    %384 = vmatpush2.bf16.msra.mxu0 0
    %385 = vmatprep.subr.bf16.mxu0 0
    %386 = vmatpush2.bf16.msra.mxu0 0
    %387 = vmatprep.subr.bf16.mxu0 0
    %388 = vmatpush2.bf16.msra.mxu0 0
    %389 = vmatprep.mubr.bf16.mxu0 0
    %390 = vmatmul.mubr.bf16.gmra.mxu0 %v195
    %v391 = vpop.f32.mrf.mxu0
    %v392 = vadd.f32 0.0, %v391
    %v393 = vpop.f32.mrf.mxu0
    %v394 = vadd.f32 0.0, %v393
    %v395 = vpop.f32.mrf.mxu0
    %v396 = vadd.f32 0.0, %v395
    %v397 = vpop.f32.mrf.mxu0
    %v398 = vadd.f32 0.0, %v397
    %399 = vdwg.mxu0
    %400 = vmatprep.subr.bf16.mxu0 %v324
    %401 = vmatpush1.bf16.msra.mxu0 %v323
    %402 = vmatprep.subr.bf16.mxu0 %v320
    %403 = vmatpush1.bf16.msra.mxu0 %v319
    %404 = vmatprep.subr.bf16.mxu0 %v316
    %405 = vmatpush1.bf16.msra.mxu0 %v315
    %406 = vmatprep.subr.bf16.mxu0 %v312
    %407 = vmatpush1.bf16.msra.mxu0 %v311
    %408 = vmatprep.subr.bf16.mxu0 %v308
    %409 = vmatpush1.bf16.msra.mxu0 %v307
    %410 = vmatprep.subr.bf16.mxu0 %v304
    %411 = vmatpush1.bf16.msra.mxu0 %v303
    %412 = vmatprep.subr.bf16.mxu0 %v300
    %413 = vmatpush1.bf16.msra.mxu0 %v299
    %414 = vmatprep.subr.bf16.mxu0 %v296
    %415 = vmatpush1.bf16.msra.mxu0 %v295
    %416 = vmatprep.subr.bf16.mxu0 0
    %417 = vmatpush2.bf16.msra.mxu0 0
    %418 = vmatprep.subr.bf16.mxu0 0
    %419 = vmatpush2.bf16.msra.mxu0 0
    %420 = vmatprep.subr.bf16.mxu0 0
    %421 = vmatpush2.bf16.msra.mxu0 0
    %422 = vmatprep.subr.bf16.mxu0 0
    %423 = vmatpush2.bf16.msra.mxu0 0
    %424 = vmatprep.subr.bf16.mxu0 0
    %425 = vmatpush2.bf16.msra.mxu0 0
    %426 = vmatprep.subr.bf16.mxu0 0
    %427 = vmatpush2.bf16.msra.mxu0 0
    %428 = vmatprep.subr.bf16.mxu0 0
    %429 = vmatpush2.bf16.msra.mxu0 0
    %430 = vmatprep.subr.bf16.mxu0 0
    %431 = vmatpush2.bf16.msra.mxu0 0
    %432 = vmatprep.mubr.bf16.mxu0 0
    %433 = vmatmul.mubr.bf16.gmra.mxu0 %v195
    %v434 = vpop.f32.mrf.mxu0
    %v435 = vadd.f32 0.0, %v434
    %v436 = vpop.f32.mrf.mxu0
    %v437 = vadd.f32 0.0, %v436
    %v438 = vpop.f32.mrf.mxu0
    %v439 = vadd.f32 0.0, %v438
    %v440 = vpop.f32.mrf.mxu0
    %v441 = vadd.f32 0.0, %v440
    %442 = vdwg.mxu0
    %v445 = vunpack.c.l.b16 %v123
    %v446 = vunpack.c.l.b16 %v124
    %v447 = vpack.c.b16 %v446, %v445
    %v481 = vunpack.c.l.b16 %v125
    %v482 = vunpack.c.h.b16 %v125
    %v483 = vunpack.c.l.b16 %v126
    %v484 = vunpack.c.h.b16 %v126
    %v485 = vunpack.c.l.b16 %v127
    %v486 = vunpack.c.h.b16 %v127
    %v487 = vunpack.c.l.b16 %v128
    %v488 = vunpack.c.h.b16 %v128
    %v489 = vunpack.c.l.b16 %v129
    %v490 = vunpack.c.h.b16 %v129
    %v491 = vunpack.c.l.b16 %v130
    %v492 = vunpack.c.h.b16 %v130
    %v493 = vunpack.c.l.b16 %v131
    %v494 = vunpack.c.h.b16 %v131
    %v495 = vunpack.c.l.b16 %v132
    %v496 = vunpack.c.h.b16 %v132
    %v497 = vunpack.c.l.b16 %v133
    %v498 = vunpack.c.h.b16 %v133
    %v499 = vunpack.c.l.b16 %v134
    %v500 = vunpack.c.h.b16 %v134
    %v501 = vunpack.c.l.b16 %v135
    %v502 = vunpack.c.h.b16 %v135
    %v503 = vunpack.c.l.b16 %v136
    %v504 = vunpack.c.h.b16 %v136
    %v505 = vunpack.c.l.b16 %v137
    %v506 = vunpack.c.h.b16 %v137
    %v507 = vunpack.c.l.b16 %v138
    %v508 = vunpack.c.h.b16 %v138
    %v509 = vunpack.c.l.b16 %v139
    %v510 = vunpack.c.h.b16 %v139
    %v511 = vunpack.c.l.b16 %v140
    %v512 = vunpack.c.h.b16 %v140
    %v513 = vunpack.c.l.b16 %v141
    %v514 = vunpack.c.h.b16 %v141
    %v515 = vunpack.c.l.b16 %v142
    %v516 = vunpack.c.h.b16 %v142
    %v517 = vunpack.c.l.b16 %v143
    %v518 = vunpack.c.h.b16 %v143
    %v519 = vunpack.c.l.b16 %v144
    %v520 = vunpack.c.h.b16 %v144
    %v521 = vunpack.c.l.b16 %v145
    %v522 = vunpack.c.h.b16 %v145
    %v523 = vunpack.c.l.b16 %v146
    %v524 = vunpack.c.h.b16 %v146
    %v525 = vunpack.c.l.b16 %v147
    %v526 = vunpack.c.h.b16 %v147
    %v527 = vunpack.c.l.b16 %v148
    %v528 = vunpack.c.h.b16 %v148
    %v529 = vunpack.c.l.b16 %v149
    %v530 = vunpack.c.h.b16 %v149
    %v531 = vunpack.c.l.b16 %v150
    %v532 = vunpack.c.h.b16 %v150
    %v533 = vunpack.c.l.b16 %v151
    %v534 = vunpack.c.h.b16 %v151
    %v535 = vunpack.c.l.b16 %v152
    %v536 = vunpack.c.h.b16 %v152
    %v537 = vunpack.c.l.b16 %v153
    %v538 = vunpack.c.h.b16 %v153
    %v539 = vunpack.c.l.b16 %v154
    %v540 = vunpack.c.h.b16 %v154
    %v541 = vunpack.c.l.b16 %v155
    %v542 = vunpack.c.h.b16 %v155
    %v543 = vunpack.c.l.b16 %v156
    %v544 = vunpack.c.h.b16 %v156
    %v545 = vpack.c.b16 %v485, %v481
    %v546 = vpack.c.b16 %v486, %v482
    %v547 = vpack.c.b16 %v487, %v483
    %v548 = vpack.c.b16 %v488, %v484
    %v549 = vpack.c.b16 %v493, %v489
    %v550 = vpack.c.b16 %v494, %v490
    %v551 = vpack.c.b16 %v495, %v491
    %v552 = vpack.c.b16 %v496, %v492
    %v553 = vpack.c.b16 %v501, %v497
    %v554 = vpack.c.b16 %v502, %v498
    %v555 = vpack.c.b16 %v503, %v499
    %v556 = vpack.c.b16 %v504, %v500
    %v557 = vpack.c.b16 %v509, %v505
    %v558 = vpack.c.b16 %v510, %v506
    %v559 = vpack.c.b16 %v511, %v507
    %v560 = vpack.c.b16 %v512, %v508
    %v561 = vpack.c.b16 %v517, %v513
    %v562 = vpack.c.b16 %v518, %v514
    %v563 = vpack.c.b16 %v519, %v515
    %v564 = vpack.c.b16 %v520, %v516
    %v565 = vpack.c.b16 %v525, %v521
    %v566 = vpack.c.b16 %v526, %v522
    %v567 = vpack.c.b16 %v527, %v523
    %v568 = vpack.c.b16 %v528, %v524
    %v569 = vpack.c.b16 %v533, %v529
    %v570 = vpack.c.b16 %v534, %v530
    %v571 = vpack.c.b16 %v535, %v531
    %v572 = vpack.c.b16 %v536, %v532
    %v573 = vpack.c.b16 %v541, %v537
    %v574 = vpack.c.b16 %v542, %v538
    %v575 = vpack.c.b16 %v543, %v539
    %v576 = vpack.c.b16 %v544, %v540
    %609 = vmatprep.subr.bf16.mxu0 %v574
    %610 = vmatpush1.bf16.msra.mxu0 %v573
    %611 = vmatprep.subr.bf16.mxu0 %v570
    %612 = vmatpush1.bf16.msra.mxu0 %v569
    %613 = vmatprep.subr.bf16.mxu0 %v566
    %614 = vmatpush1.bf16.msra.mxu0 %v565
    %615 = vmatprep.subr.bf16.mxu0 %v562
    %616 = vmatpush1.bf16.msra.mxu0 %v561
    %617 = vmatprep.subr.bf16.mxu0 %v558
    %618 = vmatpush1.bf16.msra.mxu0 %v557
    %619 = vmatprep.subr.bf16.mxu0 %v554
    %620 = vmatpush1.bf16.msra.mxu0 %v553
    %621 = vmatprep.subr.bf16.mxu0 %v550
    %622 = vmatpush1.bf16.msra.mxu0 %v549
    %623 = vmatprep.subr.bf16.mxu0 %v546
    %624 = vmatpush1.bf16.msra.mxu0 %v545
    %625 = vmatprep.subr.bf16.mxu0 0
    %626 = vmatpush2.bf16.msra.mxu0 0
    %627 = vmatprep.subr.bf16.mxu0 0
    %628 = vmatpush2.bf16.msra.mxu0 0
    %629 = vmatprep.subr.bf16.mxu0 0
    %630 = vmatpush2.bf16.msra.mxu0 0
    %631 = vmatprep.subr.bf16.mxu0 0
    %632 = vmatpush2.bf16.msra.mxu0 0
    %633 = vmatprep.subr.bf16.mxu0 0
    %634 = vmatpush2.bf16.msra.mxu0 0
    %635 = vmatprep.subr.bf16.mxu0 0
    %636 = vmatpush2.bf16.msra.mxu0 0
    %637 = vmatprep.subr.bf16.mxu0 0
    %638 = vmatpush2.bf16.msra.mxu0 0
    %639 = vmatprep.subr.bf16.mxu0 0
    %640 = vmatpush2.bf16.msra.mxu0 0
    %641 = vmatprep.mubr.bf16.mxu0 0
    %642 = vmatmul.mubr.bf16.gmra.mxu0 %v447
    %v643 = vpop.f32.mrf.mxu0
    %v644 = vadd.f32 %v392, %v643
    %v645 = vpop.f32.mrf.mxu0
    %v646 = vadd.f32 %v394, %v645
    %v647 = vpop.f32.mrf.mxu0
    %v648 = vadd.f32 %v396, %v647
    %v649 = vpop.f32.mrf.mxu0
    %v650 = vadd.f32 %v398, %v649
    %651 = vdwg.mxu0
    %652 = vmatprep.subr.bf16.mxu0 %v576
    %653 = vmatpush1.bf16.msra.mxu0 %v575
    %654 = vmatprep.subr.bf16.mxu0 %v572
    %655 = vmatpush1.bf16.msra.mxu0 %v571
    %656 = vmatprep.subr.bf16.mxu0 %v568
    %657 = vmatpush1.bf16.msra.mxu0 %v567
    %658 = vmatprep.subr.bf16.mxu0 %v564
    %659 = vmatpush1.bf16.msra.mxu0 %v563
    %660 = vmatprep.subr.bf16.mxu0 %v560
    %661 = vmatpush1.bf16.msra.mxu0 %v559
    %662 = vmatprep.subr.bf16.mxu0 %v556
    %663 = vmatpush1.bf16.msra.mxu0 %v555
    %664 = vmatprep.subr.bf16.mxu0 %v552
    %665 = vmatpush1.bf16.msra.mxu0 %v551
    %666 = vmatprep.subr.bf16.mxu0 %v548
    %667 = vmatpush1.bf16.msra.mxu0 %v547
    %668 = vmatprep.subr.bf16.mxu0 0
    %669 = vmatpush2.bf16.msra.mxu0 0
    %670 = vmatprep.subr.bf16.mxu0 0
    %671 = vmatpush2.bf16.msra.mxu0 0
    %672 = vmatprep.subr.bf16.mxu0 0
    %673 = vmatpush2.bf16.msra.mxu0 0
    %674 = vmatprep.subr.bf16.mxu0 0
    %675 = vmatpush2.bf16.msra.mxu0 0
    %676 = vmatprep.subr.bf16.mxu0 0
    %677 = vmatpush2.bf16.msra.mxu0 0
    %678 = vmatprep.subr.bf16.mxu0 0
    %679 = vmatpush2.bf16.msra.mxu0 0
    %680 = vmatprep.subr.bf16.mxu0 0
    %681 = vmatpush2.bf16.msra.mxu0 0
    %682 = vmatprep.subr.bf16.mxu0 0
    %683 = vmatpush2.bf16.msra.mxu0 0
    %684 = vmatprep.mubr.bf16.mxu0 0
    %685 = vmatmul.mubr.bf16.gmra.mxu0 %v447
    %v686 = vpop.f32.mrf.mxu0
    %v687 = vadd.f32 %v435, %v686
    %v688 = vpop.f32.mrf.mxu0
    %v689 = vadd.f32 %v437, %v688
    %v690 = vpop.f32.mrf.mxu0
    %v691 = vadd.f32 %v439, %v690
    %v692 = vpop.f32.mrf.mxu0
    %v693 = vadd.f32 %v441, %v692
    %694 = vdwg.mxu0
    %v695 = vld [vmem:[%s4] sm:$0xf]
    %v697 = vlaneseq
    %v698 = vshrl.u32 %v697, 7
    %v699 = vsub.s32 0, %v698
    %v700 = vrot.slane %v695, %v699
    %v701 = vlaneseq
    %v702 = vshrl.u32 %v701, 7
    %v703 = vsub.s32 1, %v702
    %v704 = vrot.slane %v695, %v703
    %v705 = vlaneseq
    %v706 = vshrl.u32 %v705, 7
    %v707 = vsub.s32 2, %v706
    %v708 = vrot.slane %v695, %v707
    %v709 = vlaneseq
    %v710 = vshrl.u32 %v709, 7
    %v711 = vsub.s32 3, %v710
    %v712 = vrot.slane %v695, %v711
    %v717 = vadd.f32 %v644, %v700
    %v718 = vadd.f32 %v646, %v704
    %v719 = vadd.f32 %v687, %v708
    %v720 = vadd.f32 %v689, %v712
    %v721 = vadd.f32 %v648, %v700
    %v722 = vadd.f32 %v650, %v704
    %v723 = vadd.f32 %v691, %v708
    %v724 = vadd.f32 %v693, %v712
    %v725 = vmax.f32 %v717, 0.0
    %v726 = vmax.f32 %v718, 0.0
    %v727 = vmax.f32 %v719, 0.0
    %v728 = vmax.f32 %v720, 0.0
    %v729 = vmax.f32 %v721, 0.0
    %v730 = vmax.f32 %v722, 0.0
    %v731 = vmax.f32 %v723, 0.0
    %v732 = vmax.f32 %v724, 0.0
    %v733 = vpack.c.bf16 %v729, %v725
    %v734 = vpack.c.bf16 %v730, %v726
    %v735 = vpack.c.bf16 %v731, %v727
    %v736 = vpack.c.bf16 %v732, %v728
    %v737 = vld [vmem:[#allocation10] sm:$0xff]
    %v738 = vld [vmem:[#allocation10 + $0x8] sm:$0xff]
    %v739 = vld [vmem:[#allocation10 + $0x10] sm:$0xff]
    %v740 = vld [vmem:[#allocation10 + $0x18] sm:$0xff]
    %v741 = vld [vmem:[#allocation10 + $0x20] sm:$0xff]
    %v742 = vld [vmem:[#allocation10 + $0x28] sm:$0xff]
    %v743 = vld [vmem:[#allocation10 + $0x30] sm:$0xff]
    %v744 = vld [vmem:[#allocation10 + $0x38] sm:$0xff]
    %v745 = vld [vmem:[#allocation10 + $0x40] sm:$0xff]
    %v746 = vld [vmem:[#allocation10 + $0x48] sm:$0xff]
    %v747 = vld [vmem:[#allocation10 + $0x50] sm:$0xff]
    %v748 = vld [vmem:[#allocation10 + $0x58] sm:$0xff]
    %v749 = vld [vmem:[#allocation10 + $0x60] sm:$0xff]
    %v750 = vld [vmem:[#allocation10 + $0x68] sm:$0xff]
    %v751 = vld [vmem:[#allocation10 + $0x70] sm:$0xff]
    %v752 = vld [vmem:[#allocation10 + $0x78] sm:$0xff]
    %v753 = vld [vmem:[#allocation10 + $0x80] sm:$0xff]
    %v754 = vld [vmem:[#allocation10 + $0x88] sm:$0xff]
    %v755 = vld [vmem:[#allocation10 + $0x90] sm:$0xff]
    %v756 = vld [vmem:[#allocation10 + $0x98] sm:$0xff]
    %v757 = vld [vmem:[#allocation10 + $0xa0] sm:$0xff]
    %v758 = vld [vmem:[#allocation10 + $0xa8] sm:$0xff]
    %v759 = vld [vmem:[#allocation10 + $0xb0] sm:$0xff]
    %v760 = vld [vmem:[#allocation10 + $0xb8] sm:$0xff]
    %v761 = vld [vmem:[#allocation10 + $0xc0] sm:$0xff]
    %v762 = vld [vmem:[#allocation10 + $0xc8] sm:$0xff]
    %v763 = vld [vmem:[#allocation10 + $0xd0] sm:$0xff]
    %v764 = vld [vmem:[#allocation10 + $0xd8] sm:$0xff]
    %v765 = vld [vmem:[#allocation10 + $0xe0] sm:$0xff]
    %v766 = vld [vmem:[#allocation10 + $0xe8] sm:$0xff]
    %v767 = vld [vmem:[#allocation10 + $0xf0] sm:$0xff]
    %v768 = vld [vmem:[#allocation10 + $0xf8] sm:$0xff]
    %v769 = vld [vmem:[#allocation10 + $0x100] sm:$0xff]
    %v770 = vld [vmem:[#allocation10 + $0x108] sm:$0xff]
    %v771 = vld [vmem:[#allocation10 + $0x110] sm:$0xff]
    %v772 = vld [vmem:[#allocation10 + $0x118] sm:$0xff]
    %v773 = vld [vmem:[#allocation10 + $0x120] sm:$0xff]
    %v774 = vld [vmem:[#allocation10 + $0x128] sm:$0xff]
    %v775 = vld [vmem:[#allocation10 + $0x130] sm:$0xff]
    %v776 = vld [vmem:[#allocation10 + $0x138] sm:$0xff]
    %v777 = vld [vmem:[#allocation10 + $0x140] sm:$0xff]
    %v778 = vld [vmem:[#allocation10 + $0x148] sm:$0xff]
    %v779 = vld [vmem:[#allocation10 + $0x150] sm:$0xff]
    %v780 = vld [vmem:[#allocation10 + $0x158] sm:$0xff]
    %v781 = vld [vmem:[#allocation10 + $0x160] sm:$0xff]
    %v782 = vld [vmem:[#allocation10 + $0x168] sm:$0xff]
    %v783 = vld [vmem:[#allocation10 + $0x170] sm:$0xff]
    %v784 = vld [vmem:[#allocation10 + $0x178] sm:$0xff]
    %v785 = vld [vmem:[#allocation10 + $0x180] sm:$0xff]
    %v786 = vld [vmem:[#allocation10 + $0x188] sm:$0xff]
    %v787 = vld [vmem:[#allocation10 + $0x190] sm:$0xff]
    %v788 = vld [vmem:[#allocation10 + $0x198] sm:$0xff]
    %v789 = vld [vmem:[#allocation10 + $0x1a0] sm:$0xff]
    %v790 = vld [vmem:[#allocation10 + $0x1a8] sm:$0xff]
    %v791 = vld [vmem:[#allocation10 + $0x1b0] sm:$0xff]
    %v792 = vld [vmem:[#allocation10 + $0x1b8] sm:$0xff]
    %v793 = vld [vmem:[#allocation10 + $0x1c0] sm:$0xff]
    %v794 = vld [vmem:[#allocation10 + $0x1c8] sm:$0xff]
    %v795 = vld [vmem:[#allocation10 + $0x1d0] sm:$0xff]
    %v796 = vld [vmem:[#allocation10 + $0x1d8] sm:$0xff]
    %v797 = vld [vmem:[#allocation10 + $0x1e0] sm:$0xff]
    %v798 = vld [vmem:[#allocation10 + $0x1e8] sm:$0xff]
    %v799 = vld [vmem:[#allocation10 + $0x1f0] sm:$0xff]
    %v800 = vld [vmem:[#allocation10 + $0x1f8] sm:$0xff]
    %v801 = vld [vmem:[%s6] sm:$0x3]
    %v803 = vlaneseq
    %v804 = vshrl.u32 %v803, 7
    %v805 = vsub.s32 0, %v804
    %v806 = vrot.slane %v801, %v805
    %v807 = vlaneseq
    %v808 = vshrl.u32 %v807, 7
    %v809 = vsub.s32 1, %v808
    %v810 = vrot.slane %v801, %v809
    %v877 = vunpack.c.l.b16 %v737
    %v878 = vunpack.c.h.b16 %v737
    %v879 = vunpack.c.l.b16 %v738
    %v880 = vunpack.c.h.b16 %v738
    %v881 = vunpack.c.l.b16 %v739
    %v882 = vunpack.c.h.b16 %v739
    %v883 = vunpack.c.l.b16 %v740
    %v884 = vunpack.c.h.b16 %v740
    %v885 = vunpack.c.l.b16 %v741
    %v886 = vunpack.c.h.b16 %v741
    %v887 = vunpack.c.l.b16 %v742
    %v888 = vunpack.c.h.b16 %v742
    %v889 = vunpack.c.l.b16 %v743
    %v890 = vunpack.c.h.b16 %v743
    %v891 = vunpack.c.l.b16 %v744
    %v892 = vunpack.c.h.b16 %v744
    %v893 = vunpack.c.l.b16 %v745
    %v894 = vunpack.c.h.b16 %v745
    %v895 = vunpack.c.l.b16 %v746
    %v896 = vunpack.c.h.b16 %v746
    %v897 = vunpack.c.l.b16 %v747
    %v898 = vunpack.c.h.b16 %v747
    %v899 = vunpack.c.l.b16 %v748
    %v900 = vunpack.c.h.b16 %v748
    %v901 = vunpack.c.l.b16 %v749
    %v902 = vunpack.c.h.b16 %v749
    %v903 = vunpack.c.l.b16 %v750
    %v904 = vunpack.c.h.b16 %v750
    %v905 = vunpack.c.l.b16 %v751
    %v906 = vunpack.c.h.b16 %v751
    %v907 = vunpack.c.l.b16 %v752
    %v908 = vunpack.c.h.b16 %v752
    %v909 = vunpack.c.l.b16 %v753
    %v910 = vunpack.c.h.b16 %v753
    %v911 = vunpack.c.l.b16 %v754
    %v912 = vunpack.c.h.b16 %v754
    %v913 = vunpack.c.l.b16 %v755
    %v914 = vunpack.c.h.b16 %v755
    %v915 = vunpack.c.l.b16 %v756
    %v916 = vunpack.c.h.b16 %v756
    %v917 = vunpack.c.l.b16 %v757
    %v918 = vunpack.c.h.b16 %v757
    %v919 = vunpack.c.l.b16 %v758
    %v920 = vunpack.c.h.b16 %v758
    %v921 = vunpack.c.l.b16 %v759
    %v922 = vunpack.c.h.b16 %v759
    %v923 = vunpack.c.l.b16 %v760
    %v924 = vunpack.c.h.b16 %v760
    %v925 = vunpack.c.l.b16 %v761
    %v926 = vunpack.c.h.b16 %v761
    %v927 = vunpack.c.l.b16 %v762
    %v928 = vunpack.c.h.b16 %v762
    %v929 = vunpack.c.l.b16 %v763
    %v930 = vunpack.c.h.b16 %v763
    %v931 = vunpack.c.l.b16 %v764
    %v932 = vunpack.c.h.b16 %v764
    %v933 = vunpack.c.l.b16 %v765
    %v934 = vunpack.c.h.b16 %v765
    %v935 = vunpack.c.l.b16 %v766
    %v936 = vunpack.c.h.b16 %v766
    %v937 = vunpack.c.l.b16 %v767
    %v938 = vunpack.c.h.b16 %v767
    %v939 = vunpack.c.l.b16 %v768
    %v940 = vunpack.c.h.b16 %v768
    %v941 = vunpack.c.l.b16 %v769
    %v942 = vunpack.c.h.b16 %v769
    %v943 = vunpack.c.l.b16 %v770
    %v944 = vunpack.c.h.b16 %v770
    %v945 = vunpack.c.l.b16 %v771
    %v946 = vunpack.c.h.b16 %v771
    %v947 = vunpack.c.l.b16 %v772
    %v948 = vunpack.c.h.b16 %v772
    %v949 = vunpack.c.l.b16 %v773
    %v950 = vunpack.c.h.b16 %v773
    %v951 = vunpack.c.l.b16 %v774
    %v952 = vunpack.c.h.b16 %v774
    %v953 = vunpack.c.l.b16 %v775
    %v954 = vunpack.c.h.b16 %v775
    %v955 = vunpack.c.l.b16 %v776
    %v956 = vunpack.c.h.b16 %v776
    %v957 = vunpack.c.l.b16 %v777
    %v958 = vunpack.c.h.b16 %v777
    %v959 = vunpack.c.l.b16 %v778
    %v960 = vunpack.c.h.b16 %v778
    %v961 = vunpack.c.l.b16 %v779
    %v962 = vunpack.c.h.b16 %v779
    %v963 = vunpack.c.l.b16 %v780
    %v964 = vunpack.c.h.b16 %v780
    %v965 = vunpack.c.l.b16 %v781
    %v966 = vunpack.c.h.b16 %v781
    %v967 = vunpack.c.l.b16 %v782
    %v968 = vunpack.c.h.b16 %v782
    %v969 = vunpack.c.l.b16 %v783
    %v970 = vunpack.c.h.b16 %v783
    %v971 = vunpack.c.l.b16 %v784
    %v972 = vunpack.c.h.b16 %v784
    %v973 = vunpack.c.l.b16 %v785
    %v974 = vunpack.c.h.b16 %v785
    %v975 = vunpack.c.l.b16 %v786
    %v976 = vunpack.c.h.b16 %v786
    %v977 = vunpack.c.l.b16 %v787
    %v978 = vunpack.c.h.b16 %v787
    %v979 = vunpack.c.l.b16 %v788
    %v980 = vunpack.c.h.b16 %v788
    %v981 = vunpack.c.l.b16 %v789
    %v982 = vunpack.c.h.b16 %v789
    %v983 = vunpack.c.l.b16 %v790
    %v984 = vunpack.c.h.b16 %v790
    %v985 = vunpack.c.l.b16 %v791
    %v986 = vunpack.c.h.b16 %v791
    %v987 = vunpack.c.l.b16 %v792
    %v988 = vunpack.c.h.b16 %v792
    %v989 = vunpack.c.l.b16 %v793
    %v990 = vunpack.c.h.b16 %v793
    %v991 = vunpack.c.l.b16 %v794
    %v992 = vunpack.c.h.b16 %v794
    %v993 = vunpack.c.l.b16 %v795
    %v994 = vunpack.c.h.b16 %v795
    %v995 = vunpack.c.l.b16 %v796
    %v996 = vunpack.c.h.b16 %v796
    %v997 = vunpack.c.l.b16 %v797
    %v998 = vunpack.c.h.b16 %v797
    %v999 = vunpack.c.l.b16 %v798
    %v1000 = vunpack.c.h.b16 %v798
    %v1001 = vunpack.c.l.b16 %v799
    %v1002 = vunpack.c.h.b16 %v799
    %v1003 = vunpack.c.l.b16 %v800
    %v1004 = vunpack.c.h.b16 %v800
    %v1005 = vpack.c.b16 %v879, %v877
    %v1006 = vpack.c.b16 %v880, %v878
    %v1007 = vpack.c.b16 %v883, %v881
    %v1008 = vpack.c.b16 %v884, %v882
    %v1009 = vpack.c.b16 %v887, %v885
    %v1010 = vpack.c.b16 %v888, %v886
    %v1011 = vpack.c.b16 %v891, %v889
    %v1012 = vpack.c.b16 %v892, %v890
    %v1013 = vpack.c.b16 %v895, %v893
    %v1014 = vpack.c.b16 %v896, %v894
    %v1015 = vpack.c.b16 %v899, %v897
    %v1016 = vpack.c.b16 %v900, %v898
    %v1017 = vpack.c.b16 %v903, %v901
    %v1018 = vpack.c.b16 %v904, %v902
    %v1019 = vpack.c.b16 %v907, %v905
    %v1020 = vpack.c.b16 %v908, %v906
    %v1021 = vpack.c.b16 %v911, %v909
    %v1022 = vpack.c.b16 %v912, %v910
    %v1023 = vpack.c.b16 %v915, %v913
    %v1024 = vpack.c.b16 %v916, %v914
    %v1025 = vpack.c.b16 %v919, %v917
    %v1026 = vpack.c.b16 %v920, %v918
    %v1027 = vpack.c.b16 %v923, %v921
    %v1028 = vpack.c.b16 %v924, %v922
    %v1029 = vpack.c.b16 %v927, %v925
    %v1030 = vpack.c.b16 %v928, %v926
    %v1031 = vpack.c.b16 %v931, %v929
    %v1032 = vpack.c.b16 %v932, %v930
    %v1033 = vpack.c.b16 %v935, %v933
    %v1034 = vpack.c.b16 %v936, %v934
    %v1035 = vpack.c.b16 %v939, %v937
    %v1036 = vpack.c.b16 %v940, %v938
    %v1037 = vpack.c.b16 %v943, %v941
    %v1038 = vpack.c.b16 %v944, %v942
    %v1039 = vpack.c.b16 %v947, %v945
    %v1040 = vpack.c.b16 %v948, %v946
    %v1041 = vpack.c.b16 %v951, %v949
    %v1042 = vpack.c.b16 %v952, %v950
    %v1043 = vpack.c.b16 %v955, %v953
    %v1044 = vpack.c.b16 %v956, %v954
    %v1045 = vpack.c.b16 %v959, %v957
    %v1046 = vpack.c.b16 %v960, %v958
    %v1047 = vpack.c.b16 %v963, %v961
    %v1048 = vpack.c.b16 %v964, %v962
    %v1049 = vpack.c.b16 %v967, %v965
    %v1050 = vpack.c.b16 %v968, %v966
    %v1051 = vpack.c.b16 %v971, %v969
    %v1052 = vpack.c.b16 %v972, %v970
    %v1053 = vpack.c.b16 %v975, %v973
    %v1054 = vpack.c.b16 %v976, %v974
    %v1055 = vpack.c.b16 %v979, %v977
    %v1056 = vpack.c.b16 %v980, %v978
    %v1057 = vpack.c.b16 %v983, %v981
    %v1058 = vpack.c.b16 %v984, %v982
    %v1059 = vpack.c.b16 %v987, %v985
    %v1060 = vpack.c.b16 %v988, %v986
    %v1061 = vpack.c.b16 %v991, %v989
    %v1062 = vpack.c.b16 %v992, %v990
    %v1063 = vpack.c.b16 %v995, %v993
    %v1064 = vpack.c.b16 %v996, %v994
    %v1065 = vpack.c.b16 %v999, %v997
    %v1066 = vpack.c.b16 %v1000, %v998
    %v1067 = vpack.c.b16 %v1003, %v1001
    %v1068 = vpack.c.b16 %v1004, %v1002
    %1133 = vmatprep.subr.bf16.mxu0 %v1020
    %1134 = vmatpush1.bf16.msra.mxu0 %v1019
    %1135 = vmatprep.subr.bf16.mxu0 %v1018
    %1136 = vmatpush1.bf16.msra.mxu0 %v1017
    %1137 = vmatprep.subr.bf16.mxu0 %v1016
    %1138 = vmatpush1.bf16.msra.mxu0 %v1015
    %1139 = vmatprep.subr.bf16.mxu0 %v1014
    %1140 = vmatpush1.bf16.msra.mxu0 %v1013
    %1141 = vmatprep.subr.bf16.mxu0 %v1012
    %1142 = vmatpush1.bf16.msra.mxu0 %v1011
    %1143 = vmatprep.subr.bf16.mxu0 %v1010
    %1144 = vmatpush1.bf16.msra.mxu0 %v1009
    %1145 = vmatprep.subr.bf16.mxu0 %v1008
    %1146 = vmatpush1.bf16.msra.mxu0 %v1007
    %1147 = vmatprep.subr.bf16.mxu0 %v1006
    %1148 = vmatpush1.bf16.msra.mxu0 %v1005
    %1149 = vmatprep.subr.bf16.mxu0 %v1036
    %1150 = vmatpush2.bf16.msra.mxu0 %v1035
    %1151 = vmatprep.subr.bf16.mxu0 %v1034
    %1152 = vmatpush2.bf16.msra.mxu0 %v1033
    %1153 = vmatprep.subr.bf16.mxu0 %v1032
    %1154 = vmatpush2.bf16.msra.mxu0 %v1031
    %1155 = vmatprep.subr.bf16.mxu0 %v1030
    %1156 = vmatpush2.bf16.msra.mxu0 %v1029
    %1157 = vmatprep.subr.bf16.mxu0 %v1028
    %1158 = vmatpush2.bf16.msra.mxu0 %v1027
    %1159 = vmatprep.subr.bf16.mxu0 %v1026
    %1160 = vmatpush2.bf16.msra.mxu0 %v1025
    %1161 = vmatprep.subr.bf16.mxu0 %v1024
    %1162 = vmatpush2.bf16.msra.mxu0 %v1023
    %1163 = vmatprep.subr.bf16.mxu0 %v1022
    %1164 = vmatpush2.bf16.msra.mxu0 %v1021
    %1165 = vmatprep.mubr.bf16.mxu0 %v734
    %1166 = vmatmul.mubr.bf16.gmra.mxu0 %v733
    %v1167 = vpop.f32.mrf.mxu0
    %v1168 = vadd.f32 %v806, %v1167
    %v1169 = vpop.f32.mrf.mxu0
    %v1170 = vadd.f32 %v810, %v1169
    %v1171 = vpop.f32.mrf.mxu0
    %v1172 = vadd.f32 %v806, %v1171
    %v1173 = vpop.f32.mrf.mxu0
    %v1174 = vadd.f32 %v810, %v1173
    %1175 = vdwg.mxu0
    %1176 = vmatprep.subr.bf16.mxu0 %v1052
    %1177 = vmatpush1.bf16.msra.mxu0 %v1051
    %1178 = vmatprep.subr.bf16.mxu0 %v1050
    %1179 = vmatpush1.bf16.msra.mxu0 %v1049
    %1180 = vmatprep.subr.bf16.mxu0 %v1048
    %1181 = vmatpush1.bf16.msra.mxu0 %v1047
    %1182 = vmatprep.subr.bf16.mxu0 %v1046
    %1183 = vmatpush1.bf16.msra.mxu0 %v1045
    %1184 = vmatprep.subr.bf16.mxu0 %v1044
    %1185 = vmatpush1.bf16.msra.mxu0 %v1043
    %1186 = vmatprep.subr.bf16.mxu0 %v1042
    %1187 = vmatpush1.bf16.msra.mxu0 %v1041
    %1188 = vmatprep.subr.bf16.mxu0 %v1040
    %1189 = vmatpush1.bf16.msra.mxu0 %v1039
    %1190 = vmatprep.subr.bf16.mxu0 %v1038
    %1191 = vmatpush1.bf16.msra.mxu0 %v1037
    %1192 = vmatprep.subr.bf16.mxu0 %v1068
    %1193 = vmatpush2.bf16.msra.mxu0 %v1067
    %1194 = vmatprep.subr.bf16.mxu0 %v1066
    %1195 = vmatpush2.bf16.msra.mxu0 %v1065
    %1196 = vmatprep.subr.bf16.mxu0 %v1064
    %1197 = vmatpush2.bf16.msra.mxu0 %v1063
    %1198 = vmatprep.subr.bf16.mxu0 %v1062
    %1199 = vmatpush2.bf16.msra.mxu0 %v1061
    %1200 = vmatprep.subr.bf16.mxu0 %v1060
    %1201 = vmatpush2.bf16.msra.mxu0 %v1059
    %1202 = vmatprep.subr.bf16.mxu0 %v1058
    %1203 = vmatpush2.bf16.msra.mxu0 %v1057
    %1204 = vmatprep.subr.bf16.mxu0 %v1056
    %1205 = vmatpush2.bf16.msra.mxu0 %v1055
    %1206 = vmatprep.subr.bf16.mxu0 %v1054
    %1207 = vmatpush2.bf16.msra.mxu0 %v1053
    %1208 = vmatprep.mubr.bf16.mxu0 %v736
    %1209 = vmatmul.mubr.bf16.gmra.mxu0 %v735
    %v1210 = vpop.f32.mrf.mxu0
    %v1211 = vadd.f32 %v1168, %v1210
    %v1212 = vpop.f32.mrf.mxu0
    %v1213 = vadd.f32 %v1170, %v1212
    %v1214 = vpop.f32.mrf.mxu0
    %v1215 = vadd.f32 %v1172, %v1214
    %v1216 = vpop.f32.mrf.mxu0
    %v1217 = vadd.f32 %v1174, %v1216
    %1218 = vdwg.mxu0
    %v1219 = vmax.f32 %v1211, 0.0
    %v1220 = vmax.f32 %v1213, 0.0
    %v1221 = vmax.f32 %v1215, 0.0
    %v1222 = vmax.f32 %v1217, 0.0
    %v1223 = vpack.c.bf16 %v1221, %v1219
    %v1224 = vpack.c.bf16 %v1222, %v1220
    %v1225 = vld [vmem:[#allocation11] sm:$0xf]
    %v1226 = vld [vmem:[#allocation11 + $0x4] sm:$0xf]
    %v1227 = vld [vmem:[#allocation11 + $0x8] sm:$0xf]
    %v1228 = vld [vmem:[#allocation11 + $0xc] sm:$0xf]
    %v1229 = vld [vmem:[#allocation11 + $0x10] sm:$0xf]
    %v1230 = vld [vmem:[#allocation11 + $0x14] sm:$0xf]
    %v1231 = vld [vmem:[#allocation11 + $0x18] sm:$0xf]
    %v1232 = vld [vmem:[#allocation11 + $0x1c] sm:$0xf]
    %v1233 = vld [vmem:[#allocation11 + $0x20] sm:$0xf]
    %v1234 = vld [vmem:[#allocation11 + $0x24] sm:$0xf]
    %v1235 = vld [vmem:[#allocation11 + $0x28] sm:$0xf]
    %v1236 = vld [vmem:[#allocation11 + $0x2c] sm:$0xf]
    %v1237 = vld [vmem:[#allocation11 + $0x30] sm:$0xf]
    %v1238 = vld [vmem:[#allocation11 + $0x34] sm:$0xf]
    %v1239 = vld [vmem:[#allocation11 + $0x38] sm:$0xf]
    %v1240 = vld [vmem:[#allocation11 + $0x3c] sm:$0xf]
    %v1241 = vld [vmem:[#allocation11 + $0x40] sm:$0xf]
    %v1242 = vld [vmem:[#allocation11 + $0x44] sm:$0xf]
    %v1243 = vld [vmem:[#allocation11 + $0x48] sm:$0xf]
    %v1244 = vld [vmem:[#allocation11 + $0x4c] sm:$0xf]
    %v1245 = vld [vmem:[#allocation11 + $0x50] sm:$0xf]
    %v1246 = vld [vmem:[#allocation11 + $0x54] sm:$0xf]
    %v1247 = vld [vmem:[#allocation11 + $0x58] sm:$0xf]
    %v1248 = vld [vmem:[#allocation11 + $0x5c] sm:$0xf]
    %v1249 = vld [vmem:[#allocation11 + $0x60] sm:$0xf]
    %v1250 = vld [vmem:[#allocation11 + $0x64] sm:$0xf]
    %v1251 = vld [vmem:[#allocation11 + $0x68] sm:$0xf]
    %v1252 = vld [vmem:[#allocation11 + $0x6c] sm:$0xf]
    %v1253 = vld [vmem:[#allocation11 + $0x70] sm:$0xf]
    %v1254 = vld [vmem:[#allocation11 + $0x74] sm:$0xf]
    %v1255 = vld [vmem:[#allocation11 + $0x78] sm:$0xf]
    %v1256 = vld [vmem:[#allocation11 + $0x7c] sm:$0xf]
    %v1257 = vld [vmem:[%s8] sm:$0x1]
    %v1259 = vlaneseq
    %v1260 = vshrl.u32 %v1259, 7
    %v1261 = vsub.s32 0, %v1260
    %v1262 = vrot.slane %v1257, %v1261
    %v1296 = vunpack.c.l.b16 %v1225
    %v1297 = vunpack.c.l.b16 %v1226
    %v1298 = vunpack.c.l.b16 %v1227
    %v1299 = vunpack.c.l.b16 %v1228
    %v1300 = vunpack.c.l.b16 %v1229
    %v1301 = vunpack.c.l.b16 %v1230
    %v1302 = vunpack.c.l.b16 %v1231
    %v1303 = vunpack.c.l.b16 %v1232
    %v1304 = vunpack.c.l.b16 %v1233
    %v1305 = vunpack.c.l.b16 %v1234
    %v1306 = vunpack.c.l.b16 %v1235
    %v1307 = vunpack.c.l.b16 %v1236
    %v1308 = vunpack.c.l.b16 %v1237
    %v1309 = vunpack.c.l.b16 %v1238
    %v1310 = vunpack.c.l.b16 %v1239
    %v1311 = vunpack.c.l.b16 %v1240
    %v1312 = vunpack.c.l.b16 %v1241
    %v1313 = vunpack.c.l.b16 %v1242
    %v1314 = vunpack.c.l.b16 %v1243
    %v1315 = vunpack.c.l.b16 %v1244
    %v1316 = vunpack.c.l.b16 %v1245
    %v1317 = vunpack.c.l.b16 %v1246
    %v1318 = vunpack.c.l.b16 %v1247
    %v1319 = vunpack.c.l.b16 %v1248
    %v1320 = vunpack.c.l.b16 %v1249
    %v1321 = vunpack.c.l.b16 %v1250
    %v1322 = vunpack.c.l.b16 %v1251
    %v1323 = vunpack.c.l.b16 %v1252
    %v1324 = vunpack.c.l.b16 %v1253
    %v1325 = vunpack.c.l.b16 %v1254
    %v1326 = vunpack.c.l.b16 %v1255
    %v1327 = vunpack.c.l.b16 %v1256
    %v1328 = vpack.c.b16 %v1297, %v1296
    %v1329 = vpack.c.b16 %v1299, %v1298
    %v1330 = vpack.c.b16 %v1301, %v1300
    %v1331 = vpack.c.b16 %v1303, %v1302
    %v1332 = vpack.c.b16 %v1305, %v1304
    %v1333 = vpack.c.b16 %v1307, %v1306
    %v1334 = vpack.c.b16 %v1309, %v1308
    %v1335 = vpack.c.b16 %v1311, %v1310
    %v1336 = vpack.c.b16 %v1313, %v1312
    %v1337 = vpack.c.b16 %v1315, %v1314
    %v1338 = vpack.c.b16 %v1317, %v1316
    %v1339 = vpack.c.b16 %v1319, %v1318
    %v1340 = vpack.c.b16 %v1321, %v1320
    %v1341 = vpack.c.b16 %v1323, %v1322
    %v1342 = vpack.c.b16 %v1325, %v1324
    %v1343 = vpack.c.b16 %v1327, %v1326
    %1360 = vmatprep.subr.bf16.mxu0 0
    %1361 = vmatpush1.bf16.msra.mxu0 %v1335
    %1362 = vmatprep.subr.bf16.mxu0 0
    %1363 = vmatpush1.bf16.msra.mxu0 %v1334
    %1364 = vmatprep.subr.bf16.mxu0 0
    %1365 = vmatpush1.bf16.msra.mxu0 %v1333
    %1366 = vmatprep.subr.bf16.mxu0 0
    %1367 = vmatpush1.bf16.msra.mxu0 %v1332
    %1368 = vmatprep.subr.bf16.mxu0 0
    %1369 = vmatpush1.bf16.msra.mxu0 %v1331
    %1370 = vmatprep.subr.bf16.mxu0 0
    %1371 = vmatpush1.bf16.msra.mxu0 %v1330
    %1372 = vmatprep.subr.bf16.mxu0 0
    %1373 = vmatpush1.bf16.msra.mxu0 %v1329
    %1374 = vmatprep.subr.bf16.mxu0 0
    %1375 = vmatpush1.bf16.msra.mxu0 %v1328
    %1376 = vmatprep.subr.bf16.mxu0 0
    %1377 = vmatpush2.bf16.msra.mxu0 %v1343
    %1378 = vmatprep.subr.bf16.mxu0 0
    %1379 = vmatpush2.bf16.msra.mxu0 %v1342
    %1380 = vmatprep.subr.bf16.mxu0 0
    %1381 = vmatpush2.bf16.msra.mxu0 %v1341
    %1382 = vmatprep.subr.bf16.mxu0 0
    %1383 = vmatpush2.bf16.msra.mxu0 %v1340
    %1384 = vmatprep.subr.bf16.mxu0 0
    %1385 = vmatpush2.bf16.msra.mxu0 %v1339
    %1386 = vmatprep.subr.bf16.mxu0 0
    %1387 = vmatpush2.bf16.msra.mxu0 %v1338
    %1388 = vmatprep.subr.bf16.mxu0 0
    %1389 = vmatpush2.bf16.msra.mxu0 %v1337
    %1390 = vmatprep.subr.bf16.mxu0 0
    %1391 = vmatpush2.bf16.msra.mxu0 %v1336
    %1392 = vmatprep.mubr.bf16.mxu0 %v1224
    %1393 = vmatmul.mubr.bf16.gmra.mxu0 %v1223
    %v1394 = vpop.f32.mrf.mxu0
    %v1395 = vadd.f32 %v1262, %v1394
    %v1396 = vpop.f32.mrf.mxu0
    %v1397 = vpop.f32.mrf.mxu0
    %v1398 = vadd.f32 %v1262, %v1397
    %v1399 = vpop.f32.mrf.mxu0
    %1400 = vdwg.mxu0
    %v1401 = vmax.f32 %v1395, 0.0
    %v1402 = vmax.f32 %v1398, 0.0
    %v1403 = vld [vmem:[%s9] sm:$0x1]
    %v1405 = vlaneseq
    %v1406 = vshrl.u32 %v1405, 7
    %v1407 = vsub.s32 0, %v1406
    %v1408 = vrot.slane %v1403, %v1407
    %v1410 = vmul.f32 %v1401, %v1408
    %v1411 = vmul.f32 %v1402, %v1408
    %1412 = vadd.xlane.f32.xlu0 %v1410
    %v1413 = vpop.xlane.xlu0 %1412
    %1414 = vadd.xlane.f32.xlu0 %v1411
    %v1415 = vpop.xlane.xlu0 %1414
    %v1416 = vld [vmem:[#allocation2] sm:$0x1]
    %v1418 = vlaneseq
    %v1419 = vshrl.u32 %v1418, 7
    %v1420 = vsub.s32 0, %v1419
    %v1421 = vrot.slane %v1416, %v1420
    %v1423 = vadd.f32 %v1413, %v1421
    %v1424 = vadd.f32 %v1415, %v1421
    %v1425 = vsub.f32 0.0, %v1423
    %v1426 = vsub.f32 0.0, %v1424
    %v1427 = vmul.f32 %v1425, 1.442695
    %v1428 = vpow.pop %v1427
    %v1429 = vmul.f32 %v1426, 1.442695
    %v1430 = vpow.pop %v1429
    %v1431 = vadd.f32 %v1428, 1.0
    %v1432 = vadd.f32 %v1430, 1.0
    %v1433 = vrcp.pop %v1431
    %v1434 = vrcp.pop %v1432
    %vm1435 = vcmask 7168
    %1436 = vst.msk [vmem:[%s11] sm:$0xff] %vm1435, %v1433
    %1437 = vst.msk [vmem:[%s11 + $0x8] sm:$0xff] %vm1435, %v1434
    // Predicated region
    $region70: #{tpu_custom_call.1} parent=1 // pred_check
      _
    $region71: #{tpu_custom_call.1} parent=1 // pred_check_branch
      %1439 = sbr.rel (0) target = $region73
    $region72: #{tpu_custom_call.1} parent=1 // pred_region
      _
    $region73: #{tpu_custom_call.1} parent=1 // pred_fallthru
      _
    // Predicated region
    $region74: #{tpu_custom_call.1} parent=1 // pred_check
      _
    $region75: #{tpu_custom_call.1} parent=1 // pred_check_branch
      %1441 = sbr.rel (0) target = $region77
    $region76: #{tpu_custom_call.1} parent=1 // pred_region
      _
    $region77: #{tpu_custom_call.1} parent=1 // pred_fallthru
      _
    %1442 = vsyncpa [#allocation4], 1
    %1443 = vsyncpa [#allocation6], 1
    %1444 = vsyncpa [#allocation9], 1
    %1445 = vsyncpa [#allocation12], 1

</llo_original>
